<compile_context>
chip_gen: v5e
topology: v5e:2x2
jax: 0.10.0
libtpu: 0.0.40
codegen_flags: <defaults>
</compile_context>

<pallas_src>
import math

import jax
import jax.numpy as jnp
from jax.experimental import pallas as pl
from jax.experimental.pallas import tpu as pltpu


# ---------------------------------------------------------------------------
# Stage 1: node projection  h = x @ W,  s_src = h @ a1,  s_dst = h @ a2
# ---------------------------------------------------------------------------
def _projection_kernel(x_ref, w_ref, a1_ref, a2_ref, h_ref, ssrc_ref, sdst_ref):
    h = jnp.dot(x_ref[...], w_ref[...], preferred_element_type=jnp.float32)
    h_ref[...] = h.astype(h_ref.dtype)
    ssrc_ref[...] = jnp.sum(h * a1_ref[...], axis=-1, keepdims=True)
    sdst_ref[...] = jnp.sum(h * a2_ref[...], axis=-1, keepdims=True)


# ---------------------------------------------------------------------------
# Stage 2: masked softmax attention + aggregation (online softmax over k tiles)
# ---------------------------------------------------------------------------
def _make_attention_kernel(alpha: float, concat: bool):
    def kernel(adj_ref, ssrc_ref, sdstT_ref, h_ref, out_ref, m_scr, l_scr, acc_scr):
        k = pl.program_id(1)

        @pl.when(k == 0)
        def _init():
            m_scr[...] = jnp.full_like(m_scr, -jnp.inf)
            l_scr[...] = jnp.zeros_like(l_scr)
            acc_scr[...] = jnp.zeros_like(acc_scr)

        # Per-edge logits: rank-1 broadcast add (s_dst already transposed outside).
        logits = ssrc_ref[...] + sdstT_ref[...]                      # (TM, TK)
        lrelu = jnp.where(logits > 0, logits, alpha * logits)        # LeakyReLU
        masked = jnp.where(adj_ref[...] > 0, lrelu, -9e15)           # int8 mask

        # Online softmax accumulation across the neighbor (k) axis.
        m_prev = m_scr[...]
        m_new = jnp.maximum(m_prev, jnp.max(masked, axis=-1, keepdims=True))
        scale = jnp.exp(m_prev - m_new)                              # (TM, 1)
        p = jnp.exp(masked - m_new)                                  # (TM, TK)
        l_scr[...] = scale * l_scr[...] + jnp.sum(p, axis=-1, keepdims=True)
        acc_scr[...] = scale * acc_scr[...] + jnp.dot(
            p.astype(h_ref.dtype), h_ref[...], preferred_element_type=jnp.float32)
        m_scr[...] = m_new

        @pl.when(k == pl.num_programs(1) - 1)
        def _finish():
            # Exact divide keeps the result within ~1e-5 of the reference;
            # pl.reciprocal(l_scr[...], approx=True) is a cheaper EUP alternative.
            h_prime = acc_scr[...] / l_scr[...]
            if concat:
                h_prime = jnp.where(h_prime > 0, h_prime, jnp.exp(h_prime) - 1.0)
            out_ref[...] = h_prime.astype(out_ref.dtype)

    return kernel


# ---------------------------------------------------------------------------
# Wrapper
# ---------------------------------------------------------------------------
def graph_attention_layer(x, adj, W, a, *, alpha=0.2, concat=True,
                          block_m=128, block_k=256):
    """Forward pass of GraphAttentionLayer (concat selectable, eval-mode dropout)."""
    x = jnp.asarray(x, jnp.float32)
    W = jnp.asarray(W, jnp.float32)
    a = jnp.asarray(a, jnp.float32)

    N, Fin = x.shape
    Fout = W.shape[1]
    assert a.shape == (2 * Fout, 1), "a must have shape (2*out_features, 1)"

    # Split `a` into src / dst halves as (1, Fout) row vectors.
    a1 = a[:Fout, 0].reshape(1, Fout)
    a2 = a[Fout:, 0].reshape(1, Fout)

    # Edge mask as int8: 4x less HBM traffic than f32 on the dominant N^2 stream.
    adj_mask = (adj > 0).astype(jnp.int8)

    # Pad the node axis so both tile sizes divide it.  Padded rows/cols are
    # masked out (and padded rows sliced off at the end).
    blk = block_m * block_k // math.gcd(block_m, block_k)
    n_pad = pl.cdiv(N, blk) * blk
    if n_pad != N:
        x = jnp.pad(x, ((0, n_pad - N), (0, 0)))
        adj_mask = jnp.pad(adj_mask, ((0, n_pad - N), (0, n_pad - N)))

    # ---- Stage 1: projection, tiled over node rows -------------------------
    h, s_src, s_dst = pl.pallas_call(
        _projection_kernel,
        grid=(n_pad // block_m,),
        in_specs=[
            pl.BlockSpec((block_m, Fin), lambda i: (i, 0)),   # x row tile
            pl.BlockSpec((Fin, Fout), lambda i: (0, 0)),      # W (whole)
            pl.BlockSpec((1, Fout), lambda i: (0, 0)),        # a1
            pl.BlockSpec((1, Fout), lambda i: (0, 0)),        # a2
        ],
        out_specs=(
            pl.BlockSpec((block_m, Fout), lambda i: (i, 0)),  # h
            pl.BlockSpec((block_m, 1), lambda i: (i, 0)),     # s_src
            pl.BlockSpec((block_m, 1), lambda i: (i, 0)),     # s_dst
        ),
        out_shape=(
            jax.ShapeDtypeStruct((n_pad, Fout), jnp.float32),
            jax.ShapeDtypeStruct((n_pad, 1), jnp.float32),
            jax.ShapeDtypeStruct((n_pad, 1), jnp.float32),
        ),
        compiler_params=pltpu.CompilerParams(
            dimension_semantics=("parallel",)),
    )(x, W, a1, a2)

    # Pre-transposed dst scores as a (1, N) row -> in-kernel logits are a
    # broadcast add, no per-tile XLU transpose.  (Vector reshape, not a transpose.)
    s_dst_t = s_dst.reshape(1, n_pad)

    # ---- Stage 2: attention + aggregation, tiled over the adjacency --------
    kernel = _make_attention_kernel(float(alpha), bool(concat))
    out = pl.pallas_call(
        kernel,
        grid=(n_pad // block_m, n_pad // block_k),
        in_specs=[
            pl.BlockSpec((block_m, block_k), lambda i, k: (i, k)),  # adj tile (int8)
            pl.BlockSpec((block_m, 1), lambda i, k: (i, 0)),        # s_src
            pl.BlockSpec((1, block_k), lambda i, k: (0, k)),        # s_dst^T
            pl.BlockSpec((block_k, Fout), lambda i, k: (k, 0)),     # h (k tile)
        ],
        out_specs=pl.BlockSpec((block_m, Fout), lambda i, k: (i, 0)),
        out_shape=jax.ShapeDtypeStruct((n_pad, Fout), jnp.float32),
        scratch_shapes=[
            pltpu.VMEM((block_m, 1), jnp.float32),      # running max m
            pltpu.VMEM((block_m, 1), jnp.float32),      # running sum l
            pltpu.VMEM((block_m, Fout), jnp.float32),   # accumulator
        ],
        compiler_params=pltpu.CompilerParams(
            dimension_semantics=("parallel", "arbitrary"),
            vmem_limit_bytes=32 * 1024 * 1024,
        ),
    )(adj_mask, s_src, s_dst_t, h)

    return out[:N]


# ---------------------------------------------------------------------------
# Pure-JAX reference mirroring the PyTorch semantics (eval mode)
# ---------------------------------------------------------------------------
def reference_forward(x, adj, W, a, *, alpha=0.2, concat=True):
    Fout = W.shape[1]
    h = jnp.dot(x, W)
    a1, a2 = a[:Fout, :], a[Fout:, :]            # (Fout, 1) each
    logits = jnp.dot(h, a1) + jnp.dot(h, a2).T   # (N, N)
    e = jnp.where(logits > 0, logits, alpha * logits)
    attention = jnp.where(adj > 0, e, -9e15)
    attention = jax.nn.softmax(attention, axis=1)
    h_prime = jnp.dot(attention, h)
    if concat:
        h_prime = jnp.where(h_prime > 0, h_prime, jnp.exp(h_prime) - 1.0)
    return h_prime


def xavier_uniform(key, shape, gain):
    fan_in, fan_out = shape[0], shape[1]
    bound = gain * math.sqrt(6.0 / (fan_in + fan_out))
    return jax.random.uniform(key, shape, dtype=jnp.float32,
                              minval=-bound, maxval=bound)


if __name__ == "__main__":
    # Small but non-trivial problem: exercises both grid axes and the padding
    # path (N=384 pads to 512 with TM=128, TK=256).  Fout=128 keeps the output
    # lane-dense.
    N, in_features, out_features = 384, 32, 128
    alpha = 0.2

    key = jax.random.PRNGKey(0)
    k_x, k_adj, k_w, k_a = jax.random.split(key, 4)

    x = jax.random.normal(k_x, (N, in_features), dtype=jnp.float32)

    # Random 0/1 adjacency with self-loops (every row has >= 1 edge).
    adj = (jax.random.uniform(k_adj, (N, N)) < 0.05).astype(jnp.float32)
    adj = jnp.maximum(adj, jnp.eye(N, dtype=jnp.float32))

    # Deterministic parameter init matching nn.init.xavier_uniform_(gain=1.414).
    W = xavier_uniform(k_w, (in_features, out_features), gain=1.414)
    a = xavier_uniform(k_a, (2 * out_features, 1), gain=1.414)

    out = graph_attention_layer(x, adj, W, a, alpha=alpha, concat=True)
    out = jax.block_until_ready(out)

    with jax.default_matmul_precision("highest"):
        ref = reference_forward(x, adj, W, a, alpha=alpha, concat=True)

    assert out.shape == (N, out_features)
    assert bool(jnp.allclose(out, ref, atol=1e-3, rtol=1e-3)), "mismatch vs reference"

    print("KERNEL_OK")
</pallas_src>

<mosaic_0001>
module attributes {stable_mosaic.version = 11 : i64} {
  func.func @_projection_kernel(%arg0: i32, %arg1: memref<128x32xf32, #tpu.memory_space<vmem>>, %arg2: memref<32x128xf32, #tpu.memory_space<vmem>>, %arg3: memref<1x128xf32, #tpu.memory_space<vmem>>, %arg4: memref<1x128xf32, #tpu.memory_space<vmem>>, %arg5: memref<128x128xf32, #tpu.memory_space<vmem>>, %arg6: memref<128x1xf32, #tpu.memory_space<vmem>>, %arg7: memref<128x1xf32, #tpu.memory_space<vmem>>) attributes {dimension_semantics = [#tpu.dimension_semantics<parallel>], iteration_bounds = array<i64: 4>, scalar_prefetch = 0 : i64, scratch_operands = 0 : i64, tpu.core_type = #tpu.core_type<tc>, window_params = [{transform_indices = @transform_0, window_bounds = array<i64: 128, 32>}, {pipeline_mode = #tpu.pipeline_mode<synchronous>, transform_indices = @transform_1, window_bounds = array<i64: 32, 128>}, {pipeline_mode = #tpu.pipeline_mode<synchronous>, transform_indices = @transform_2, window_bounds = array<i64: 1, 128>}, {pipeline_mode = #tpu.pipeline_mode<synchronous>, transform_indices = @transform_3, window_bounds = array<i64: 1, 128>}, {transform_indices = @transform_4, window_bounds = array<i64: 128, 128>}, {transform_indices = @transform_5, window_bounds = array<i64: 128, 1>}, {transform_indices = @transform_6, window_bounds = array<i64: 128, 1>}]} {
    %c0 = arith.constant 0 : index
    %c0_0 = arith.constant 0 : index
    %0 = vector.load %arg1[%c0, %c0_0] : memref<128x32xf32, #tpu.memory_space<vmem>>, vector<128x32xf32>
    %c0_1 = arith.constant 0 : index
    %c0_2 = arith.constant 0 : index
    %1 = vector.load %arg2[%c0_1, %c0_2] : memref<32x128xf32, #tpu.memory_space<vmem>>, vector<32x128xf32>
    %cst = arith.constant dense<0.000000e+00> : vector<128x128xf32>
    %2 = tpu.matmul %0, %1, %cst {dimension_numbers = #tpu.dot_dimension_numbers<[1], [0], [0], [1], [0, 0, 1, 1], [], []>} : vector<128x32xf32>, vector<32x128xf32>, vector<128x128xf32> -> vector<128x128xf32>
    %c0_3 = arith.constant 0 : index
    %c0_4 = arith.constant 0 : index
    %3 = vector.load %arg5[%c0_3, %c0_4] : memref<128x128xf32, #tpu.memory_space<vmem>>, vector<128x128xf32>
    tpu.vector_store %arg5[%c0_3, %c0_4], %2 {strides = array<i32>} : memref<128x128xf32, #tpu.memory_space<vmem>>, vector<128x128xf32>,
    %c0_5 = arith.constant 0 : index
    %c0_6 = arith.constant 0 : index
    %4 = vector.load %arg3[%c0_5, %c0_6] : memref<1x128xf32, #tpu.memory_space<vmem>>, vector<1x128xf32>
    %5 = vector.broadcast %4 : vector<1x128xf32> to vector<128x128xf32>
    %6 = arith.mulf %2, %5 : vector<128x128xf32>
    %cst_7 = arith.constant dense<0.000000e+00> : vector<128xf32>
    %7 = vector.multi_reduction <add>, %6, %cst_7 [1] : vector<128x128xf32> to vector<128xf32>
    %8 = vector.shape_cast %7 : vector<128xf32> to vector<128x1xf32>
    %c0_8 = arith.constant 0 : index
    %c0_9 = arith.constant 0 : index
    %9 = vector.load %arg6[%c0_8, %c0_9] : memref<128x1xf32, #tpu.memory_space<vmem>>, vector<128x1xf32>
    tpu.vector_store %arg6[%c0_8, %c0_9], %8 {strides = array<i32>} : memref<128x1xf32, #tpu.memory_space<vmem>>, vector<128x1xf32>,
    %c0_10 = arith.constant 0 : index
    %c0_11 = arith.constant 0 : index
    %10 = vector.load %arg4[%c0_10, %c0_11] : memref<1x128xf32, #tpu.memory_space<vmem>>, vector<1x128xf32>
    %11 = vector.broadcast %10 : vector<1x128xf32> to vector<128x128xf32>
    %12 = arith.mulf %2, %11 : vector<128x128xf32>
    %cst_12 = arith.constant dense<0.000000e+00> : vector<128xf32>
    %13 = vector.multi_reduction <add>, %12, %cst_12 [1] : vector<128x128xf32> to vector<128xf32>
    %14 = vector.shape_cast %13 : vector<128xf32> to vector<128x1xf32>
    %c0_13 = arith.constant 0 : index
    %c0_14 = arith.constant 0 : index
    %15 = vector.load %arg7[%c0_13, %c0_14] : memref<128x1xf32, #tpu.memory_space<vmem>>, vector<128x1xf32>
    tpu.vector_store %arg7[%c0_13, %c0_14], %14 {strides = array<i32>} : memref<128x1xf32, #tpu.memory_space<vmem>>, vector<128x1xf32>,
    return
  }
  func.func @transform_0(%arg0: i32) -> (i32, i32) {
    %c0_i32 = arith.constant 0 : i32
    %c0_i32_0 = arith.constant 0 : i32
    return %arg0, %c0_i32 : i32, i32
  }
  func.func @transform_1(%arg0: i32) -> (i32, i32) {
    %c0_i32 = arith.constant 0 : i32
    %c0_i32_0 = arith.constant 0 : i32
    %c0_i32_1 = arith.constant 0 : i32
    return %c0_i32, %c0_i32_0 : i32, i32
  }
  func.func @transform_2(%arg0: i32) -> (i32, i32) {
    %c0_i32 = arith.constant 0 : i32
    %c0_i32_0 = arith.constant 0 : i32
    %c0_i32_1 = arith.constant 0 : i32
    return %c0_i32, %c0_i32_0 : i32, i32
  }
  func.func @transform_3(%arg0: i32) -> (i32, i32) {
    %c0_i32 = arith.constant 0 : i32
    %c0_i32_0 = arith.constant 0 : i32
    %c0_i32_1 = arith.constant 0 : i32
    return %c0_i32, %c0_i32_0 : i32, i32
  }
  func.func @transform_4(%arg0: i32) -> (i32, i32) {
    %c0_i32 = arith.constant 0 : i32
    %c0_i32_0 = arith.constant 0 : i32
    return %arg0, %c0_i32 : i32, i32
  }
  func.func @transform_5(%arg0: i32) -> (i32, i32) {
    %c0_i32 = arith.constant 0 : i32
    %c0_i32_0 = arith.constant 0 : i32
    return %arg0, %c0_i32 : i32, i32
  }
  func.func @transform_6(%arg0: i32) -> (i32, i32) {
    %c0_i32 = arith.constant 0 : i32
    %c0_i32_0 = arith.constant 0 : i32
    return %arg0, %c0_i32 : i32, i32
  }
}

</mosaic_0001>

<llo_original>
// kernel: tpu_custom_call.1
$region0: #{tpu_custom_call.1}
  #allocation0 [shape = 'u32[]', space=smem, size = 0x4, offset = 0x4, fixed_abs, tag = 'smem constant byte address 0x4 - core index']
  #allocation1 [shape = 'u32[72,128]{1,0:T(1,128)}', space=vmem, size = 0x9000, scoped, tag = 'internal scratch']
  %s0 = inlined_call_operand.vmem [shape: f32[512,32], index: 0, kind: input, shape index: {}]
  %s1 = inlined_call_operand.vmem [shape: f32[32,128], index: 1, kind: input, shape index: {}]
  %s2 = inlined_call_operand.vmem [shape: f32[1,128], index: 2, kind: input, shape index: {}]
  %s3 = inlined_call_operand.vmem [shape: f32[1,128], index: 3, kind: input, shape index: {}]
  %s4 = inlined_call_operand.hbm [shape: f32[512,128], index: 4, kind: output, shape index: {0}]
  %s5 = inlined_call_operand.vmem [shape: f32[512,1], index: 5, kind: output, shape index: {1}]
  %s6 = inlined_call_operand.vmem [shape: f32[512,1], index: 6, kind: output, shape index: {2}]
  %7 = xla_tuple %s4, %s5, %s6
  %s8 = sld [smem:[#allocation0]]
  $region65: #{tpu_custom_call.1} parent=0
    _
  %s10 = ssub.s32 1, %s8
  %s11 = scalar_select 0, %s10, %s8
  $region1: #{tpu_custom_call.1} parent=0
    #allocation2 [shape = 'u8[131072]{0}', space=vmem, size = 0x20000, scoped, tag = 'output window, operand 0']
    #allocation3 [shape = 's32[2]{0}', space=sflag, size = 0x8, scoped, tag = 'scoped memory for tpu_custom_call.1']
    %12 = vsyncpa [#allocation3], 0
    %s13 = scalar_lea.sflag [#allocation3], 1
    %14 = vsyncpa %s13, 0
    loop: start=0, step=1, limit=6
    $region2: #{tpu_custom_call.1} parent=1 // loop_pre_header
      _
    $region3: #{tpu_custom_call.1} parent=1 // loop_header
      %s16 = sphi 0, %s20
      %p17 = scmp.ge.s32.totalorder %s16, 6
      %s26 = sphi 0, %s28
      %s29 = sphi 0, %s26
      %s30 = sphi 0, %s29
      %s46 = sphi 0, %s30
      %s50 = sphi 0, %s50
      %s52 = sphi 0, %s50
      %s53 = sphi 0, %s52
      %s67 = sphi 0, %s53
      %s71 = sphi 0, %s71
      %s73 = sphi 0, %s71
      %s74 = sphi 0, %s73
      %s88 = sphi 0, %s74
      %s92 = sphi 0, %s92
      %s94 = sphi 0, %s92
      %s95 = sphi 0, %s94
      %s109 = sphi 0, %s95
      %s115 = sphi 0, %s117
      %s118 = sphi 0, %s115
      %s119 = sphi 0, %s118
      %s135 = sphi 0, %s119
      %s141 = sphi 0, %s143
      %s144 = sphi 0, %s141
      %s145 = sphi 0, %s144
      %s161 = sphi 0, %s145
      %s167 = sphi 0, %s169
      %s170 = sphi 0, %s167
      %s171 = sphi 0, %s170
      %s187 = sphi 0, %s171
    $region4: #{tpu_custom_call.1} parent=1 // loop_header_branch
      %19 = sbr.rel (%p17) target = $region8
    $region5: #{tpu_custom_call.1} parent=1 // loop_body
      %s21 = ssub.s32 %s16, 1
      %s22 = ssub.s32 %s16, 2
      %s23 = sadd.s32 %s16, 1
      %s24 = ssub.s32 %s16, %s23
      %p25 = scmp.eq.s32.totalorder %s24, 0
      %s27 = sadd.s32 %s26, 1
      %s28 = scalar_select %p25, %s26, %s27
      %p31 = pneg %p25
      %p32 = scmp.eq.s32.totalorder %s16, 3
      %p33 = por %p31, %p32
      %p34 = scmp.ne.s32.totalorder %s26, %s29
      %p35 = scmp.eq.s32.totalorder %s16, 0
      %p36 = por %p34, %p35
      %p37 = scmp.ne.s32.totalorder %s26, %s29
      %p38 = scmp.eq.s32.totalorder %s21, 3
      %p39 = por %p37, %p38
      %p40 = scmp.ne.s32.totalorder %s29, %s30
      %p41 = scmp.eq.s32.totalorder %s21, 0
      %p42 = por %p40, %p41
      %p43 = scmp.ne.s32.totalorder %s29, %s30
      %p44 = scmp.eq.s32.totalorder %s22, 3
      %p45 = por %p43, %p44
      %p47 = scmp.ne.s32.totalorder %s30, %s46
      %p48 = scmp.eq.s32.totalorder %s22, 0
      %p49 = por %p47, %p48
      %s51 = sadd.s32 %s50, 1
      %p54 = scmp.eq.s32.totalorder %s16, 3
      %p55 = scmp.ne.s32.totalorder %s50, %s52
      %p56 = scmp.eq.s32.totalorder %s16, 0
      %p57 = por %p55, %p56
      %p58 = scmp.ne.s32.totalorder %s50, %s52
      %p59 = scmp.eq.s32.totalorder %s21, 3
      %p60 = por %p58, %p59
      %p61 = scmp.ne.s32.totalorder %s52, %s53
      %p62 = scmp.eq.s32.totalorder %s21, 0
      %p63 = por %p61, %p62
      %p64 = scmp.ne.s32.totalorder %s52, %s53
      %p65 = scmp.eq.s32.totalorder %s22, 3
      %p66 = por %p64, %p65
      %p68 = scmp.ne.s32.totalorder %s53, %s67
      %p69 = scmp.eq.s32.totalorder %s22, 0
      %p70 = por %p68, %p69
      %s72 = sadd.s32 %s71, 1
      %p75 = scmp.eq.s32.totalorder %s16, 3
      %p76 = scmp.ne.s32.totalorder %s71, %s73
      %p77 = scmp.eq.s32.totalorder %s16, 0
      %p78 = por %p76, %p77
      %p79 = scmp.ne.s32.totalorder %s71, %s73
      %p80 = scmp.eq.s32.totalorder %s21, 3
      %p81 = por %p79, %p80
      %p82 = scmp.ne.s32.totalorder %s73, %s74
      %p83 = scmp.eq.s32.totalorder %s21, 0
      %p84 = por %p82, %p83
      %p85 = scmp.ne.s32.totalorder %s73, %s74
      %p86 = scmp.eq.s32.totalorder %s22, 3
      %p87 = por %p85, %p86
      %p89 = scmp.ne.s32.totalorder %s74, %s88
      %p90 = scmp.eq.s32.totalorder %s22, 0
      %p91 = por %p89, %p90
      %s93 = sadd.s32 %s92, 1
      %p96 = scmp.eq.s32.totalorder %s16, 3
      %p97 = scmp.ne.s32.totalorder %s92, %s94
      %p98 = scmp.eq.s32.totalorder %s16, 0
      %p99 = por %p97, %p98
      %p100 = scmp.ne.s32.totalorder %s92, %s94
      %p101 = scmp.eq.s32.totalorder %s21, 3
      %p102 = por %p100, %p101
      %p103 = scmp.ne.s32.totalorder %s94, %s95
      %p104 = scmp.eq.s32.totalorder %s21, 0
      %p105 = por %p103, %p104
      %p106 = scmp.ne.s32.totalorder %s94, %s95
      %p107 = scmp.eq.s32.totalorder %s22, 3
      %p108 = por %p106, %p107
      %p110 = scmp.ne.s32.totalorder %s95, %s109
      %p111 = scmp.eq.s32.totalorder %s22, 0
      %p112 = por %p110, %p111
      %s113 = ssub.s32 %s16, %s23
      %p114 = scmp.eq.s32.totalorder %s113, 0
      %s116 = sadd.s32 %s115, 1
      %s117 = scalar_select %p114, %s115, %s116
      %p120 = pneg %p114
      %p121 = scmp.eq.s32.totalorder %s16, 3
      %p122 = por %p120, %p121
      %p123 = scmp.ne.s32.totalorder %s115, %s118
      %p124 = scmp.eq.s32.totalorder %s16, 0
      %p125 = por %p123, %p124
      %p126 = scmp.ne.s32.totalorder %s115, %s118
      %p127 = scmp.eq.s32.totalorder %s21, 3
      %p128 = por %p126, %p127
      %p129 = scmp.ne.s32.totalorder %s118, %s119
      %p130 = scmp.eq.s32.totalorder %s21, 0
      %p131 = por %p129, %p130
      %p132 = scmp.ne.s32.totalorder %s118, %s119
      %p133 = scmp.eq.s32.totalorder %s22, 3
      %p134 = por %p132, %p133
      %p136 = scmp.ne.s32.totalorder %s119, %s135
      %p137 = scmp.eq.s32.totalorder %s22, 0
      %p138 = por %p136, %p137
      %s139 = ssub.s32 %s16, %s23
      %p140 = scmp.eq.s32.totalorder %s139, 0
      %s142 = sadd.s32 %s141, 1
      %s143 = scalar_select %p140, %s141, %s142
      %p146 = pneg %p140
      %p147 = scmp.eq.s32.totalorder %s16, 3
      %p148 = por %p146, %p147
      %p149 = scmp.ne.s32.totalorder %s141, %s144
      %p150 = scmp.eq.s32.totalorder %s16, 0
      %p151 = por %p149, %p150
      %p152 = scmp.ne.s32.totalorder %s141, %s144
      %p153 = scmp.eq.s32.totalorder %s21, 3
      %p154 = por %p152, %p153
      %p155 = scmp.ne.s32.totalorder %s144, %s145
      %p156 = scmp.eq.s32.totalorder %s21, 0
      %p157 = por %p155, %p156
      %p158 = scmp.ne.s32.totalorder %s144, %s145
      %p159 = scmp.eq.s32.totalorder %s22, 3
      %p160 = por %p158, %p159
      %p162 = scmp.ne.s32.totalorder %s145, %s161
      %p163 = scmp.eq.s32.totalorder %s22, 0
      %p164 = por %p162, %p163
      %s165 = ssub.s32 %s16, %s23
      %p166 = scmp.eq.s32.totalorder %s165, 0
      %s168 = sadd.s32 %s167, 1
      %s169 = scalar_select %p166, %s167, %s168
      %p172 = pneg %p166
      %p173 = scmp.eq.s32.totalorder %s16, 3
      %p174 = por %p172, %p173
      %p175 = scmp.ne.s32.totalorder %s167, %s170
      %p176 = scmp.eq.s32.totalorder %s16, 0
      %p177 = por %p175, %p176
      %p178 = scmp.ne.s32.totalorder %s167, %s170
      %p179 = scmp.eq.s32.totalorder %s21, 3
      %p180 = por %p178, %p179
      %p181 = scmp.ne.s32.totalorder %s170, %s171
      %p182 = scmp.eq.s32.totalorder %s21, 0
      %p183 = por %p181, %p182
      %p184 = scmp.ne.s32.totalorder %s170, %s171
      %p185 = scmp.eq.s32.totalorder %s22, 3
      %p186 = por %p184, %p185
      %p188 = scmp.ne.s32.totalorder %s171, %s187
      %p189 = scmp.eq.s32.totalorder %s22, 0
      %p190 = por %p188, %p189
      %p191 = scmp.le.s32.totalorder 1, %s16
      %p192 = scmp.lt.s32.totalorder %s16, 5
      %p193 = pnand %p191, %p192
      %p194 = pneg %p193
      // Predicated region
      $region9: #{tpu_custom_call.1} parent=5 // pred_check
        _
      $region10: #{tpu_custom_call.1} parent=5 // pred_check_branch
        %196 = sbr.rel (%p193) target = $region12
      $region11: #{tpu_custom_call.1} parent=5 // pred_region
        %s197 = ssub.s32 %s16, 1
        // Predicated region
        $region13: #{tpu_custom_call.1} parent=11 // pred_check
          %p198 = pneg %p63
        $region14: #{tpu_custom_call.1} parent=11 // pred_check_branch
          %200 = sbr.rel (%p198) target = $region16
        $region15: #{tpu_custom_call.1} parent=11 // pred_region
          _
        $region16: #{tpu_custom_call.1} parent=11 // pred_fallthru
          _
        // Predicated region
        $region17: #{tpu_custom_call.1} parent=11 // pred_check
          %p201 = pneg %p84
        $region18: #{tpu_custom_call.1} parent=11 // pred_check_branch
          %203 = sbr.rel (%p201) target = $region20
        $region19: #{tpu_custom_call.1} parent=11 // pred_region
          _
        $region20: #{tpu_custom_call.1} parent=11 // pred_fallthru
          _
        // Predicated region
        $region21: #{tpu_custom_call.1} parent=11 // pred_check
          %p204 = pneg %p105
        $region22: #{tpu_custom_call.1} parent=11 // pred_check_branch
          %206 = sbr.rel (%p204) target = $region24
        $region23: #{tpu_custom_call.1} parent=11 // pred_region
          _
        $region24: #{tpu_custom_call.1} parent=11 // pred_fallthru
          _
      $region12: #{tpu_custom_call.1} parent=5 // pred_fallthru
        _
      %p207 = scmp.lt.s32.totalorder %s16, 4
      // Predicated region
      $region25: #{tpu_custom_call.1} parent=5 // pred_check
        %p208 = pneg %p207
      $region26: #{tpu_custom_call.1} parent=5 // pred_check_branch
        %210 = sbr.rel (%p208) target = $region28
      $region27: #{tpu_custom_call.1} parent=5 // pred_region
        // Predicated region
        $region29: #{tpu_custom_call.1} parent=27 // pred_check
          %p211 = pneg %p36
        $region30: #{tpu_custom_call.1} parent=27 // pred_check_branch
          %213 = sbr.rel (%p211) target = $region32
        $region31: #{tpu_custom_call.1} parent=27 // pred_region
          %s214 = smul.u32 16, %s16
          %p215 = scmp.lt.s32.totalorder %s214, 63
          %s216 = scalar_select %p215, %s214, 63
          %s217 = smul.addr %s216, 8
          %s218 = scalar_lea.vmem %s0, %s217
          %s219 = smul.u32 16, %s16
        $region32: #{tpu_custom_call.1} parent=27 // pred_fallthru
          _
      $region28: #{tpu_custom_call.1} parent=5 // pred_fallthru
        _
      %p220 = scmp.le.s32.totalorder 1, %s16
      %p221 = scmp.lt.s32.totalorder %s16, 5
      %p222 = pnand %p220, %p221
      %p223 = pneg %p222
      // Predicated region
      $region33: #{tpu_custom_call.1} parent=5 // pred_check
        _
      $region34: #{tpu_custom_call.1} parent=5 // pred_check_branch
        %225 = sbr.rel (%p222) target = $region36
      $region35: #{tpu_custom_call.1} parent=5 // pred_region
        %s226 = ssub.s32 %s16, 1
        %s227 = smul.u32 16, %s21
        %p228 = scmp.lt.s32.totalorder %s227, 63
        %s229 = scalar_select %p228, %s227, 63
        %s230 = smul.addr %s229, 8
        %s231 = scalar_lea.vmem %s0, %s230
        %p232 = pneg %p42
        %p233 = pneg %p39
        %p234 = pneg %p63
        %p235 = pneg %p60
        %p236 = pneg %p84
        %p237 = pneg %p81
        %p238 = pneg %p105
        %p239 = pneg %p102
        %p240 = pneg %p131
        %p241 = pneg %p128
        %s242 = sand.u32 %s118, 1
        %s243 = scalar_lea.sflag [#allocation3], %s242
        %s244 = sand.u32 %s118, 1
        %s245 = smul.addr %s244, 128
        %s246 = scalar_lea.vmem [#allocation2], %s245
        %p247 = pneg %p157
        %p248 = pneg %p154
        %s249 = smul.u32 16, %s21
        %p250 = scmp.lt.s32.totalorder %s249, 63
        %s251 = scalar_select %p250, %s249, 63
        %s252 = smul.addr %s251, 8
        %s253 = scalar_lea.vmem %s5, %s252
        %p254 = pneg %p183
        %p255 = pneg %p180
        %s256 = smul.u32 16, %s21
        %p257 = scmp.lt.s32.totalorder %s256, 63
        %s258 = scalar_select %p257, %s256, 63
        %s259 = smul.addr %s258, 8
        %s260 = scalar_lea.vmem %s6, %s259
        %s261 = smul.u32 16, %s21
        %p262 = scmp.lt.s32.totalorder %s261, 63
        %s263 = scalar_select %p262, %s261, 63
        %s264 = smul.addr %s263, 8
        %s265 = scalar_lea.vmem %s0, %s264
        %s266 = smul.u32 16, %s21
        %s267 = smul.u32 16, %s21
        %s268 = smul.u32 16, %s21
        %p269 = scmp.lt.s32.totalorder %s268, 63
        %s270 = scalar_select %p269, %s268, 63
        %s271 = smul.addr %s270, 8
        %s272 = scalar_lea.vmem %s5, %s271
        %s273 = smul.u32 16, %s21
        %s274 = smul.u32 16, %s21
        %p275 = scmp.lt.s32.totalorder %s274, 63
        %s276 = scalar_select %p275, %s274, 63
        %s277 = smul.addr %s276, 8
        %s278 = scalar_lea.vmem %s6, %s277
        %s279 = smul.u32 16, %s21
        %v280 = vld [vmem:[%s265] sm:$0xff]
        %v281 = vld [vmem:[%s265 + $0x8] sm:$0xff]
        %v282 = vld [vmem:[%s265 + $0x10] sm:$0xff]
        %v283 = vld [vmem:[%s265 + $0x18] sm:$0xff]
        %v284 = vld [vmem:[%s265 + $0x20] sm:$0xff]
        %v285 = vld [vmem:[%s265 + $0x28] sm:$0xff]
        %v286 = vld [vmem:[%s265 + $0x30] sm:$0xff]
        %v287 = vld [vmem:[%s265 + $0x38] sm:$0xff]
        %v288 = vld [vmem:[%s265 + $0x40] sm:$0xff]
        %v289 = vld [vmem:[%s265 + $0x48] sm:$0xff]
        %v290 = vld [vmem:[%s265 + $0x50] sm:$0xff]
        %v291 = vld [vmem:[%s265 + $0x58] sm:$0xff]
        %v292 = vld [vmem:[%s265 + $0x60] sm:$0xff]
        %v293 = vld [vmem:[%s265 + $0x68] sm:$0xff]
        %v294 = vld [vmem:[%s265 + $0x70] sm:$0xff]
        %v295 = vld [vmem:[%s265 + $0x78] sm:$0xff]
        %v296 = vld [vmem:[%s1] sm:$0xff]
        %v297 = vld [vmem:[%s1 + $0x8] sm:$0xff]
        %v298 = vld [vmem:[%s1 + $0x10] sm:$0xff]
        %v299 = vld [vmem:[%s1 + $0x18] sm:$0xff]
        %vm300 = vcmask 261120
        %v302 = vsel %vm300, %v280, 0
        %v305 = vsel %vm300, %v281, 0
        %v308 = vsel %vm300, %v282, 0
        %v311 = vsel %vm300, %v283, 0
        %v314 = vsel %vm300, %v284, 0
        %v317 = vsel %vm300, %v285, 0
        %v320 = vsel %vm300, %v286, 0
        %v323 = vsel %vm300, %v287, 0
        %v326 = vsel %vm300, %v288, 0
        %v329 = vsel %vm300, %v289, 0
        %v332 = vsel %vm300, %v290, 0
        %v335 = vsel %vm300, %v291, 0
        %v338 = vsel %vm300, %v292, 0
        %v341 = vsel %vm300, %v293, 0
        %v344 = vsel %vm300, %v294, 0
        %v347 = vsel %vm300, %v295, 0
        %349 = vmatpush.msra.mxu0 0.0
        %350 = vmatpush.msra.mxu0 0.0
        %351 = vmatpush.msra.mxu0 0.0
        %352 = vmatpush.msra.mxu0 0.0
        %353 = vmatpush.msra.mxu0 0.0
        %354 = vmatpush.msra.mxu0 0.0
        %355 = vmatpush.msra.mxu0 0.0
        %356 = vmatpush.msra.mxu0 0.0
        %357 = vmatpush.msra.mxu0 0.0
        %358 = vmatpush.msra.mxu0 0.0
        %359 = vmatpush.msra.mxu0 0.0
        %360 = vmatpush.msra.mxu0 0.0
        %361 = vmatpush.msra.mxu0 %v299
        %362 = vmatpush.msra.mxu0 %v298
        %363 = vmatpush.msra.mxu0 %v297
        %364 = vmatpush.msra.mxu0 %v296
        %365 = vmatmul.f32.gmra.mxu0 %v302
        %v366 = vpop.f32.mrf.mxu0
        %v367 = vadd.f32 0.0, %v366
        %368 = vmatmul.f32.gmra.mxu0 %v305
        %v369 = vpop.f32.mrf.mxu0
        %v370 = vadd.f32 0.0, %v369
        %371 = vmatmul.f32.gmra.mxu0 %v308
        %v372 = vpop.f32.mrf.mxu0
        %v373 = vadd.f32 0.0, %v372
        %374 = vmatmul.f32.gmra.mxu0 %v311
        %v375 = vpop.f32.mrf.mxu0
        %v376 = vadd.f32 0.0, %v375
        %377 = vmatmul.f32.gmra.mxu0 %v314
        %v378 = vpop.f32.mrf.mxu0
        %v379 = vadd.f32 0.0, %v378
        %380 = vmatmul.f32.gmra.mxu0 %v317
        %v381 = vpop.f32.mrf.mxu0
        %v382 = vadd.f32 0.0, %v381
        %383 = vmatmul.f32.gmra.mxu0 %v320
        %v384 = vpop.f32.mrf.mxu0
        %v385 = vadd.f32 0.0, %v384
        %386 = vmatmul.f32.gmra.mxu0 %v323
        %v387 = vpop.f32.mrf.mxu0
        %v388 = vadd.f32 0.0, %v387
        %389 = vmatmul.f32.gmra.mxu0 %v326
        %v390 = vpop.f32.mrf.mxu0
        %v391 = vadd.f32 0.0, %v390
        %392 = vmatmul.f32.gmra.mxu0 %v329
        %v393 = vpop.f32.mrf.mxu0
        %v394 = vadd.f32 0.0, %v393
        %395 = vmatmul.f32.gmra.mxu0 %v332
        %v396 = vpop.f32.mrf.mxu0
        %v397 = vadd.f32 0.0, %v396
        %398 = vmatmul.f32.gmra.mxu0 %v335
        %v399 = vpop.f32.mrf.mxu0
        %v400 = vadd.f32 0.0, %v399
        %401 = vmatmul.f32.gmra.mxu0 %v338
        %v402 = vpop.f32.mrf.mxu0
        %v403 = vadd.f32 0.0, %v402
        %404 = vmatmul.f32.gmra.mxu0 %v341
        %v405 = vpop.f32.mrf.mxu0
        %v406 = vadd.f32 0.0, %v405
        %407 = vmatmul.f32.gmra.mxu0 %v344
        %v408 = vpop.f32.mrf.mxu0
        %v409 = vadd.f32 0.0, %v408
        %410 = vmatmul.f32.gmra.mxu0 %v347
        %v411 = vpop.f32.mrf.mxu0
        %v412 = vadd.f32 0.0, %v411
        %413 = vdwg.mxu0
        %414 = vst [vmem:[%s246] sm:$0xff] %v367
        %415 = vst [vmem:[%s246 + $0x8] sm:$0xff] %v370
        %416 = vst [vmem:[%s246 + $0x10] sm:$0xff] %v373
        %417 = vst [vmem:[%s246 + $0x18] sm:$0xff] %v376
        %418 = vst [vmem:[%s246 + $0x20] sm:$0xff] %v379
        %419 = vst [vmem:[%s246 + $0x28] sm:$0xff] %v382
        %420 = vst [vmem:[%s246 + $0x30] sm:$0xff] %v385
        %421 = vst [vmem:[%s246 + $0x38] sm:$0xff] %v388
        %422 = vst [vmem:[%s246 + $0x40] sm:$0xff] %v391
        %423 = vst [vmem:[%s246 + $0x48] sm:$0xff] %v394
        %424 = vst [vmem:[%s246 + $0x50] sm:$0xff] %v397
        %425 = vst [vmem:[%s246 + $0x58] sm:$0xff] %v400
        %426 = vst [vmem:[%s246 + $0x60] sm:$0xff] %v403
        %427 = vst [vmem:[%s246 + $0x68] sm:$0xff] %v406
        %428 = vst [vmem:[%s246 + $0x70] sm:$0xff] %v409
        %429 = vst [vmem:[%s246 + $0x78] sm:$0xff] %v412
        %v430 = vld [vmem:[%s2] sm:$0x1]
        %v432 = vperm.slane %v430, 0
        %v434 = vmul.f32 %v367, %v432
        %v435 = vmul.f32 %v370, %v432
        %v436 = vmul.f32 %v373, %v432
        %v437 = vmul.f32 %v376, %v432
        %v438 = vmul.f32 %v379, %v432
        %v439 = vmul.f32 %v382, %v432
        %v440 = vmul.f32 %v385, %v432
        %v441 = vmul.f32 %v388, %v432
        %v442 = vmul.f32 %v391, %v432
        %v443 = vmul.f32 %v394, %v432
        %v444 = vmul.f32 %v397, %v432
        %v445 = vmul.f32 %v400, %v432
        %v446 = vmul.f32 %v403, %v432
        %v447 = vmul.f32 %v406, %v432
        %v448 = vmul.f32 %v409, %v432
        %v449 = vmul.f32 %v412, %v432
        %450 = vadd.xlane.f32.xlu0 %v434
        %v451 = vpop.xlane.xlu0 %450
        %452 = vadd.xlane.f32.xlu0 %v435
        %v453 = vpop.xlane.xlu0 %452
        %454 = vadd.xlane.f32.xlu0 %v436
        %v455 = vpop.xlane.xlu0 %454
        %456 = vadd.xlane.f32.xlu0 %v437
        %v457 = vpop.xlane.xlu0 %456
        %458 = vadd.xlane.f32.xlu0 %v438
        %v459 = vpop.xlane.xlu0 %458
        %460 = vadd.xlane.f32.xlu0 %v439
        %v461 = vpop.xlane.xlu0 %460
        %462 = vadd.xlane.f32.xlu0 %v440
        %v463 = vpop.xlane.xlu0 %462
        %464 = vadd.xlane.f32.xlu0 %v441
        %v465 = vpop.xlane.xlu0 %464
        %466 = vadd.xlane.f32.xlu0 %v442
        %v467 = vpop.xlane.xlu0 %466
        %468 = vadd.xlane.f32.xlu0 %v443
        %v469 = vpop.xlane.xlu0 %468
        %470 = vadd.xlane.f32.xlu0 %v444
        %v471 = vpop.xlane.xlu0 %470
        %472 = vadd.xlane.f32.xlu0 %v445
        %v473 = vpop.xlane.xlu0 %472
        %474 = vadd.xlane.f32.xlu0 %v446
        %v475 = vpop.xlane.xlu0 %474
        %476 = vadd.xlane.f32.xlu0 %v447
        %v477 = vpop.xlane.xlu0 %476
        %478 = vadd.xlane.f32.xlu0 %v448
        %v479 = vpop.xlane.xlu0 %478
        %480 = vadd.xlane.f32.xlu0 %v449
        %v481 = vpop.xlane.xlu0 %480
        %vm482 = vcmask 7168
        %483 = vst.msk [vmem:[%s272] sm:$0xff] %vm482, %v451
        %484 = vst.msk [vmem:[%s272 + $0x8] sm:$0xff] %vm482, %v453
        %485 = vst.msk [vmem:[%s272 + $0x10] sm:$0xff] %vm482, %v455
        %486 = vst.msk [vmem:[%s272 + $0x18] sm:$0xff] %vm482, %v457
        %487 = vst.msk [vmem:[%s272 + $0x20] sm:$0xff] %vm482, %v459
        %488 = vst.msk [vmem:[%s272 + $0x28] sm:$0xff] %vm482, %v461
        %489 = vst.msk [vmem:[%s272 + $0x30] sm:$0xff] %vm482, %v463
        %490 = vst.msk [vmem:[%s272 + $0x38] sm:$0xff] %vm482, %v465
        %491 = vst.msk [vmem:[%s272 + $0x40] sm:$0xff] %vm482, %v467
        %492 = vst.msk [vmem:[%s272 + $0x48] sm:$0xff] %vm482, %v469
        %493 = vst.msk [vmem:[%s272 + $0x50] sm:$0xff] %vm482, %v471
        %494 = vst.msk [vmem:[%s272 + $0x58] sm:$0xff] %vm482, %v473
        %495 = vst.msk [vmem:[%s272 + $0x60] sm:$0xff] %vm482, %v475
        %496 = vst.msk [vmem:[%s272 + $0x68] sm:$0xff] %vm482, %v477
        %497 = vst.msk [vmem:[%s272 + $0x70] sm:$0xff] %vm482, %v479
        %498 = vst.msk [vmem:[%s272 + $0x78] sm:$0xff] %vm482, %v481
        %v499 = vld [vmem:[%s3] sm:$0x1]
        %v501 = vperm.slane %v499, 0
        %v503 = vmul.f32 %v367, %v501
        %v504 = vmul.f32 %v370, %v501
        %v505 = vmul.f32 %v373, %v501
        %v506 = vmul.f32 %v376, %v501
        %v507 = vmul.f32 %v379, %v501
        %v508 = vmul.f32 %v382, %v501
        %v509 = vmul.f32 %v385, %v501
        %v510 = vmul.f32 %v388, %v501
        %v511 = vmul.f32 %v391, %v501
        %v512 = vmul.f32 %v394, %v501
        %v513 = vmul.f32 %v397, %v501
        %v514 = vmul.f32 %v400, %v501
        %v515 = vmul.f32 %v403, %v501
        %v516 = vmul.f32 %v406, %v501
        %v517 = vmul.f32 %v409, %v501
        %v518 = vmul.f32 %v412, %v501
        %519 = vadd.xlane.f32.xlu0 %v503
        %v520 = vpop.xlane.xlu0 %519
        %521 = vadd.xlane.f32.xlu0 %v504
        %v522 = vpop.xlane.xlu0 %521
        %523 = vadd.xlane.f32.xlu0 %v505
        %v524 = vpop.xlane.xlu0 %523
        %525 = vadd.xlane.f32.xlu0 %v506
        %v526 = vpop.xlane.xlu0 %525
        %527 = vadd.xlane.f32.xlu0 %v507
        %v528 = vpop.xlane.xlu0 %527
        %529 = vadd.xlane.f32.xlu0 %v508
        %v530 = vpop.xlane.xlu0 %529
        %531 = vadd.xlane.f32.xlu0 %v509
        %v532 = vpop.xlane.xlu0 %531
        %533 = vadd.xlane.f32.xlu0 %v510
        %v534 = vpop.xlane.xlu0 %533
        %535 = vadd.xlane.f32.xlu0 %v511
        %v536 = vpop.xlane.xlu0 %535
        %537 = vadd.xlane.f32.xlu0 %v512
        %v538 = vpop.xlane.xlu0 %537
        %539 = vadd.xlane.f32.xlu0 %v513
        %v540 = vpop.xlane.xlu0 %539
        %541 = vadd.xlane.f32.xlu0 %v514
        %v542 = vpop.xlane.xlu0 %541
        %543 = vadd.xlane.f32.xlu0 %v515
        %v544 = vpop.xlane.xlu0 %543
        %545 = vadd.xlane.f32.xlu0 %v516
        %v546 = vpop.xlane.xlu0 %545
        %547 = vadd.xlane.f32.xlu0 %v517
        %v548 = vpop.xlane.xlu0 %547
        %549 = vadd.xlane.f32.xlu0 %v518
        %v550 = vpop.xlane.xlu0 %549
        %551 = vst.msk [vmem:[%s278] sm:$0xff] %vm482, %v520
        %552 = vst.msk [vmem:[%s278 + $0x8] sm:$0xff] %vm482, %v522
        %553 = vst.msk [vmem:[%s278 + $0x10] sm:$0xff] %vm482, %v524
        %554 = vst.msk [vmem:[%s278 + $0x18] sm:$0xff] %vm482, %v526
        %555 = vst.msk [vmem:[%s278 + $0x20] sm:$0xff] %vm482, %v528
        %556 = vst.msk [vmem:[%s278 + $0x28] sm:$0xff] %vm482, %v530
        %557 = vst.msk [vmem:[%s278 + $0x30] sm:$0xff] %vm482, %v532
        %558 = vst.msk [vmem:[%s278 + $0x38] sm:$0xff] %vm482, %v534
        %559 = vst.msk [vmem:[%s278 + $0x40] sm:$0xff] %vm482, %v536
        %560 = vst.msk [vmem:[%s278 + $0x48] sm:$0xff] %vm482, %v538
        %561 = vst.msk [vmem:[%s278 + $0x50] sm:$0xff] %vm482, %v540
        %562 = vst.msk [vmem:[%s278 + $0x58] sm:$0xff] %vm482, %v542
        %563 = vst.msk [vmem:[%s278 + $0x60] sm:$0xff] %vm482, %v544
        %564 = vst.msk [vmem:[%s278 + $0x68] sm:$0xff] %vm482, %v546
        %565 = vst.msk [vmem:[%s278 + $0x70] sm:$0xff] %vm482, %v548
        %566 = vst.msk [vmem:[%s278 + $0x78] sm:$0xff] %vm482, %v550
        %s567 = sand.u32 %s118, 1
        %s568 = scalar_lea.sflag [#allocation3], %s567
        %s569 = sand.u32 %s118, 1
        %s570 = smul.addr %s569, 128
        %s571 = scalar_lea.vmem [#allocation2], %s570
        %s572 = smul.u32 16, %s21
        %p573 = scmp.lt.s32.totalorder %s572, 63
        %s574 = scalar_select %p573, %s572, 63
        %s575 = smul.addr %s574, 8
        %s576 = scalar_lea.vmem %s5, %s575
        %s577 = smul.u32 16, %s21
        %p578 = scmp.lt.s32.totalorder %s577, 63
        %s579 = scalar_select %p578, %s577, 63
        %s580 = smul.addr %s579, 8
        %s581 = scalar_lea.vmem %s6, %s580
        // Predicated region
        $region37: #{tpu_custom_call.1} parent=35 // pred_check
          %p582 = pneg %p128
        $region38: #{tpu_custom_call.1} parent=35 // pred_check_branch
          %584 = sbr.rel (%p582) target = $region40
        $region39: #{tpu_custom_call.1} parent=35 // pred_region
          %s585 = smul.u32 16, %s21
          %587 = vsyncadd %s568, 0
          %s588 = smul.addr %s585, 8
          %s589 = scalar_lea.hbm %s4, %s588
          %s590 = sshll.u32 %s571, 4
          %s591 = int_to_ptr.vmem [resolvable:$true] %s590
          %s592 = sshll.u32 %s589, 4
          %s593 = int_to_ptr.hbm [resolvable:$true] %s592
          %598 = dma.vmem_to_hbm [thread:$0]  %s591, 2048, %s593, %s568, 128, 128, 8
        $region40: #{tpu_custom_call.1} parent=35 // pred_fallthru
          _
        // Predicated region
        $region41: #{tpu_custom_call.1} parent=35 // pred_check
          %p599 = pneg %p154
        $region42: #{tpu_custom_call.1} parent=35 // pred_check_branch
          %601 = sbr.rel (%p599) target = $region44
        $region43: #{tpu_custom_call.1} parent=35 // pred_region
          %s602 = smul.u32 16, %s21
        $region44: #{tpu_custom_call.1} parent=35 // pred_fallthru
          _
        // Predicated region
        $region45: #{tpu_custom_call.1} parent=35 // pred_check
          %p603 = pneg %p180
        $region46: #{tpu_custom_call.1} parent=35 // pred_check_branch
          %605 = sbr.rel (%p603) target = $region48
        $region47: #{tpu_custom_call.1} parent=35 // pred_region
          %s606 = smul.u32 16, %s21
        $region48: #{tpu_custom_call.1} parent=35 // pred_fallthru
          _
      $region36: #{tpu_custom_call.1} parent=5 // pred_fallthru
        _
      %p607 = scmp.le.s32.totalorder 2, %s16
      // Predicated region
      $region49: #{tpu_custom_call.1} parent=5 // pred_check
        %p608 = pneg %p607
      $region50: #{tpu_custom_call.1} parent=5 // pred_check_branch
        %610 = sbr.rel (%p608) target = $region52
      $region51: #{tpu_custom_call.1} parent=5 // pred_region
        %s611 = ssub.s32 %s16, 2
        // Predicated region
        $region53: #{tpu_custom_call.1} parent=51 // pred_check
          %p612 = pneg %p134
        $region54: #{tpu_custom_call.1} parent=51 // pred_check_branch
          %614 = sbr.rel (%p612) target = $region56
        $region55: #{tpu_custom_call.1} parent=51 // pred_region
          %s615 = sand.u32 %s119, 1
          %s616 = scalar_lea.sflag [#allocation3], %s615
          %s617 = sand.u32 %s119, 1
          %s618 = smul.addr %s617, 128
          %s619 = scalar_lea.vmem [#allocation2], %s618
          %621 = dma.done %s616, 2048
        $region56: #{tpu_custom_call.1} parent=51 // pred_fallthru
          _
        // Predicated region
        $region57: #{tpu_custom_call.1} parent=51 // pred_check
          %p622 = pneg %p160
        $region58: #{tpu_custom_call.1} parent=51 // pred_check_branch
          %624 = sbr.rel (%p622) target = $region60
        $region59: #{tpu_custom_call.1} parent=51 // pred_region
          %s625 = smul.u32 16, %s22
          %p626 = scmp.lt.s32.totalorder %s625, 63
          %s627 = scalar_select %p626, %s625, 63
          %s628 = smul.addr %s627, 8
          %s629 = scalar_lea.vmem %s5, %s628
        $region60: #{tpu_custom_call.1} parent=51 // pred_fallthru
          _
        // Predicated region
        $region61: #{tpu_custom_call.1} parent=51 // pred_check
          %p630 = pneg %p186
        $region62: #{tpu_custom_call.1} parent=51 // pred_check_branch
          %632 = sbr.rel (%p630) target = $region64
        $region63: #{tpu_custom_call.1} parent=51 // pred_region
          %s633 = smul.u32 16, %s22
          %p634 = scmp.lt.s32.totalorder %s633, 63
          %s635 = scalar_select %p634, %s633, 63
          %s636 = smul.addr %s635, 8
          %s637 = scalar_lea.vmem %s6, %s636
        $region64: #{tpu_custom_call.1} parent=51 // pred_fallthru
          _
      $region52: #{tpu_custom_call.1} parent=5 // pred_fallthru
        _
    $region6: #{tpu_custom_call.1} parent=1 // loop_footer
      %s20 = sadd.s32 1, %s16
    $region7: #{tpu_custom_call.1} parent=1 // loop_footer_branch
      %15 = sbr.rel target = $region3
    $region8: #{tpu_custom_call.1} parent=1 // loop_exit
      _
    %638 = vsyncpa [#allocation3], 1
    %s639 = scalar_lea.sflag [#allocation3], 1
    %640 = vsyncpa %s639, 1

</llo_original>
